<compile_context>
chip_gen: v5e
topology: v5e:2x2
jax: 0.10.0
libtpu: 0.0.40
codegen_flags: <defaults>
</compile_context>

<pallas_src>
import functools

import jax
import jax.numpy as jnp
from jax.experimental import pallas as pl
from jax.experimental.pallas import tpu as pltpu

_INV_SQRT2 = 0.7071067811865476
_BN_EPS = 1e-5
_LANE = 128


def _gelu_exact(x):
    # PyTorch F.gelu default = exact (erf) GELU, computed in f32 on the VPU.
    return 0.5 * x * (1.0 + jax.lax.erf(x * _INV_SQRT2))


def _round_up(x, m):
    return (x + m - 1) // m * m


# ---------------------------------------------------------------------------
# In-kernel helpers
# ---------------------------------------------------------------------------
def _accum_stats(s_ref, ss_ref, c, row0, row_tile, n_valid):
    """One-pass BN statistics: accumulate sum and sum-of-squares over valid rows."""
    rid = row0 + jax.lax.broadcasted_iota(jnp.int32, (row_tile, 1), 0)
    cm = jnp.where(rid < n_valid, c, 0.0)

    @pl.when(pl.program_id(0) == 0)
    def _():
        s_ref[...] = jnp.zeros_like(s_ref)
        ss_ref[...] = jnp.zeros_like(ss_ref)

    s_ref[...] += jnp.sum(cm, axis=0, keepdims=True)
    ss_ref[...] += jnp.sum(cm * cm, axis=0, keepdims=True)


def _bn_stats(s_ref, ss_ref, n_valid):
    """mu and 1/sqrt(var+eps) from accumulated sum / sum-of-squares (biased var)."""
    inv_n = 1.0 / float(n_valid)
    mu = s_ref[...] * inv_n
    var = jnp.maximum(ss_ref[...] * inv_n - mu * mu, 0.0)
    return mu, jax.lax.rsqrt(var + _BN_EPS)


# ---------------------------------------------------------------------------
# Kernels
# ---------------------------------------------------------------------------
def _head_kernel(x_ref, w0_ref, b0_ref, w1_ref, b1_ref,
                 c_ref, g_ref, s_ref, ss_ref, *, n_valid, row_tile):
    """First Conv1d (im2col matmul) + gelu + first 1x1 conv + BN-stat accumulation."""
    h = jnp.dot(x_ref[...], w0_ref[...],
                preferred_element_type=jnp.float32) + b0_ref[...]
    g = _gelu_exact(h)
    c = jnp.dot(g.astype(jnp.bfloat16), w1_ref[...],
                preferred_element_type=jnp.float32) + b1_ref[...]
    g_ref[...] = g
    c_ref[...] = c
    _accum_stats(s_ref, ss_ref, c, pl.program_id(0) * row_tile, row_tile, n_valid)


def _block_kernel(c_in_ref, g_in_ref, s_in_ref, ss_in_ref, gam_ref, bet_ref,
                  w1_ref, b1_ref, c_ref, g_ref, s_ref, ss_ref,
                  *, n_valid, row_tile):
    """BN(prev block) + residual, then gelu + next 1x1 conv + BN-stat accumulation."""
    mu, inv_std = _bn_stats(s_in_ref, ss_in_ref, n_valid)
    h = gam_ref[...] * ((c_in_ref[...] - mu) * inv_std) + bet_ref[...] + g_in_ref[...]
    g = _gelu_exact(h)
    c = jnp.dot(g.astype(jnp.bfloat16), w1_ref[...],
                preferred_element_type=jnp.float32) + b1_ref[...]
    g_ref[...] = g
    c_ref[...] = c
    _accum_stats(s_ref, ss_ref, c, pl.program_id(0) * row_tile, row_tile, n_valid)


def _tail_kernel(c_in_ref, g_in_ref, s_in_ref, ss_in_ref, gam_ref, bet_ref,
                 wl_ref, bl_ref, out_ref, *, n_valid):
    """BN(last block) + residual, then the final Linear over channels."""
    mu, inv_std = _bn_stats(s_in_ref, ss_in_ref, n_valid)
    h = gam_ref[...] * ((c_in_ref[...] - mu) * inv_std) + bet_ref[...] + g_in_ref[...]
    out = jnp.dot(h.astype(jnp.bfloat16), wl_ref[...],
                  preferred_element_type=jnp.float32) + bl_ref[...]
    out_ref[...] = out.astype(out_ref.dtype)


# ---------------------------------------------------------------------------
# Wrapper
# ---------------------------------------------------------------------------
def cnn_head_forward(x, params, kernel_sizes, *, row_tile=1024):
    """x: (B, C_in, T) -> (B, T, n_classes), matching the PyTorch module."""
    w0, b0, w1s, b1s, gammas, betas, wl, bl = params
    B, Cin, T = x.shape
    K0 = kernel_sizes[0]
    pad = (K0 - 1) // 2
    for ks in kernel_sizes[1:]:
        # Residual add in the PyTorch module only type-checks when the inner
        # Conv1d kernel_size (ks-1)//2 equals 1 (stride 1, no padding).
        assert (ks - 1) // 2 == 1, "inner Conv1d kernel_size (ks-1)//2 must be 1"
    hidden = w0.shape[2]
    n_classes = wl.shape[1]
    n_blocks = w1s.shape[0]
    assert n_blocks >= 1

    rows = B * T
    KC = K0 * Cin
    KC_p = _round_up(KC, _LANE)
    H_p = _round_up(hidden, _LANE)
    C_p = _round_up(n_classes, _LANE)
    row_tile = _round_up(max(8, min(row_tile, _round_up(rows, 8))), 8)
    rows_p = _round_up(rows, row_tile)
    n_tiles = rows_p // row_tile
    grid = (n_tiles,)

    # ---- glue: NCW -> NWC, zero-pad time, im2col taps, row+lane pad, bf16.
    xt = jnp.transpose(x, (0, 2, 1)).astype(jnp.float32)
    xp = jnp.pad(xt, ((0, 0), (pad, pad), (0, 0)))
    xim = jnp.concatenate([xp[:, k:k + T, :] for k in range(K0)], axis=-1)  # (B,T,K0*Cin)
    xim = xim.reshape(rows, KC)
    xim = jnp.pad(xim, ((0, rows_p - rows), (0, KC_p - KC))).astype(jnp.bfloat16)

    def pad2(a, r, c, dtype):
        return jnp.pad(a, ((0, r - a.shape[0]), (0, c - a.shape[1]))).astype(dtype)

    w0_p = pad2(w0.reshape(KC, hidden), KC_p, H_p, jnp.bfloat16)
    b0_p = pad2(b0.reshape(1, hidden), 1, H_p, jnp.float32)
    w1_p = [pad2(w1s[i], H_p, H_p, jnp.bfloat16) for i in range(n_blocks)]
    b1_p = [pad2(b1s[i].reshape(1, hidden), 1, H_p, jnp.float32) for i in range(n_blocks)]
    gam_p = [pad2(gammas[i].reshape(1, hidden), 1, H_p, jnp.float32) for i in range(n_blocks)]
    bet_p = [pad2(betas[i].reshape(1, hidden), 1, H_p, jnp.float32) for i in range(n_blocks)]
    wl_p = pad2(wl, H_p, C_p, jnp.bfloat16)
    bl_p = pad2(bl.reshape(1, n_classes), 1, C_p, jnp.float32)

    def row_spec(lanes):
        return pl.BlockSpec((row_tile, lanes), lambda i: (i, 0))

    def const_spec(r, c):
        return pl.BlockSpec((r, c), lambda i: (0, 0))

    rowH_shape = jax.ShapeDtypeStruct((rows_p, H_p), jnp.float32)
    stat_shape = jax.ShapeDtypeStruct((1, H_p), jnp.float32)
    blk_out_specs = [row_spec(H_p), row_spec(H_p), const_spec(1, H_p), const_spec(1, H_p)]
    blk_out_shape = [rowH_shape, rowH_shape, stat_shape, stat_shape]
    accum_params = pltpu.CompilerParams(dimension_semantics=("arbitrary",))

    # ---- call 0: first Conv1d + gelu + 1x1 conv of block 0 + BN stats.
    c_cur, g_cur, s_cur, ss_cur = pl.pallas_call(
        functools.partial(_head_kernel, n_valid=rows, row_tile=row_tile),
        grid=grid,
        in_specs=[row_spec(KC_p), const_spec(KC_p, H_p), const_spec(1, H_p),
                  const_spec(H_p, H_p), const_spec(1, H_p)],
        out_specs=blk_out_specs,
        out_shape=blk_out_shape,
        compiler_params=accum_params,
    )(xim, w0_p, b0_p, w1_p[0], b1_p[0])

    # ---- middle calls: BN + residual of block b-1, gelu + 1x1 conv + stats of block b.
    for b in range(1, n_blocks):
        c_cur, g_cur, s_cur, ss_cur = pl.pallas_call(
            functools.partial(_block_kernel, n_valid=rows, row_tile=row_tile),
            grid=grid,
            in_specs=[row_spec(H_p), row_spec(H_p), const_spec(1, H_p), const_spec(1, H_p),
                      const_spec(1, H_p), const_spec(1, H_p),
                      const_spec(H_p, H_p), const_spec(1, H_p)],
            out_specs=blk_out_specs,
            out_shape=blk_out_shape,
            compiler_params=accum_params,
        )(c_cur, g_cur, s_cur, ss_cur, gam_p[b - 1], bet_p[b - 1], w1_p[b], b1_p[b])

    # ---- final call: BN + residual of last block, then the Linear head.
    out_p = pl.pallas_call(
        functools.partial(_tail_kernel, n_valid=rows),
        grid=grid,
        in_specs=[row_spec(H_p), row_spec(H_p), const_spec(1, H_p), const_spec(1, H_p),
                  const_spec(1, H_p), const_spec(1, H_p),
                  const_spec(H_p, C_p), const_spec(1, C_p)],
        out_specs=row_spec(C_p),
        out_shape=jax.ShapeDtypeStruct((rows_p, C_p), jnp.float32),
        compiler_params=pltpu.CompilerParams(dimension_semantics=("parallel",)),
    )(c_cur, g_cur, s_cur, ss_cur, gam_p[-1], bet_p[-1], wl_p, bl_p)

    return out_p[:rows, :n_classes].reshape(B, T, n_classes)


# ---------------------------------------------------------------------------
# Pure-JAX references (mirror the PyTorch forward, training-mode BN)
# ---------------------------------------------------------------------------
def cnn_head_reference(x, params, kernel_sizes, matmul_dtype=jnp.float32):
    w0, b0, w1s, b1s, gammas, betas, wl, bl = params
    B, Cin, T = x.shape
    K0 = kernel_sizes[0]
    pad = (K0 - 1) // 2
    dt = matmul_dtype
    xt = jnp.transpose(x, (0, 2, 1)).astype(jnp.float32)
    xp = jnp.pad(xt, ((0, 0), (pad, pad), (0, 0)))
    h = jnp.zeros((B, T, w0.shape[2]), jnp.float32)
    for k in range(K0):
        h = h + jnp.einsum('btc,ch->bth', xp[:, k:k + T, :].astype(dt),
                           w0[k].astype(dt), preferred_element_type=jnp.float32)
    h = h + b0
    for i in range(w1s.shape[0]):
        g = _gelu_exact(h)
        c = jnp.einsum('bth,hk->btk', g.astype(dt), w1s[i].astype(dt),
                       preferred_element_type=jnp.float32) + b1s[i]
        mu = jnp.mean(c, axis=(0, 1), keepdims=True)
        var = jnp.mean((c - mu) ** 2, axis=(0, 1), keepdims=True)
        h = gammas[i] * ((c - mu) * jax.lax.rsqrt(var + _BN_EPS)) + betas[i] + g
    return jnp.einsum('bth,hc->btc', h.astype(dt), wl.astype(dt),
                      preferred_element_type=jnp.float32) + bl


if __name__ == "__main__":
    # Small shapes consistent with the module: x is (batch, n_channels, n_timesteps).
    B, Cin, T = 2, 4, 16
    hidden, n_classes = 32, 8
    kernel_sizes = [3, 3, 3]          # first conv k=3; two residual blocks (1x1 convs)
    K0 = kernel_sizes[0]
    n_blocks = len(kernel_sizes) - 1

    key = jax.random.PRNGKey(0)
    keys = jax.random.split(key, 9)
    x = jax.random.normal(keys[0], (B, Cin, T), jnp.float32)

    # Deterministic synthetic parameters (shapes follow the module __init__).
    w0 = 0.1 * jax.random.normal(keys[1], (K0, Cin, hidden), jnp.float32)
    b0 = 0.1 * jax.random.normal(keys[2], (1, hidden), jnp.float32)
    w1s = 0.1 * jax.random.normal(keys[3], (n_blocks, hidden, hidden), jnp.float32)
    b1s = 0.1 * jax.random.normal(keys[4], (n_blocks, 1, hidden), jnp.float32)
    gammas = 1.0 + 0.1 * jax.random.normal(keys[5], (n_blocks, 1, hidden), jnp.float32)
    betas = 0.1 * jax.random.normal(keys[6], (n_blocks, 1, hidden), jnp.float32)
    wl = 0.1 * jax.random.normal(keys[7], (hidden, n_classes), jnp.float32)
    bl = 0.1 * jax.random.normal(keys[8], (1, n_classes), jnp.float32)
    params = (w0, b0, w1s, b1s, gammas, betas, wl, bl)

    # Single-tile grid and multi-tile grid (exercises the cross-tile BN-stat
    # accumulation path).
    out_a = jax.block_until_ready(cnn_head_forward(x, params, kernel_sizes))
    out_b = jax.block_until_ready(cnn_head_forward(x, params, kernel_sizes, row_tile=16))
    assert out_a.shape == (B, T, n_classes)
    assert out_b.shape == (B, T, n_classes)

    # Tight check against a reference that mirrors the kernel's bf16 MXU operands.
    ref_bf16 = cnn_head_reference(x, params, kernel_sizes, matmul_dtype=jnp.bfloat16)
    assert jnp.allclose(out_a, ref_bf16, atol=2e-3, rtol=2e-3), \
        f"max_err={float(jnp.max(jnp.abs(out_a - ref_bf16)))}"
    assert jnp.allclose(out_b, ref_bf16, atol=2e-3, rtol=2e-3), \
        f"max_err={float(jnp.max(jnp.abs(out_b - ref_bf16)))}"

    # Loose sanity check against the full-f32 reference (bf16 matmul rounding).
    ref_f32 = cnn_head_reference(x, params, kernel_sizes)
    assert float(jnp.max(jnp.abs(out_a - ref_f32))) < 0.1

    print("KERNEL_OK")
</pallas_src>

<mosaic_0001>
module attributes {stable_mosaic.version = 11 : i64} {
  func.func @_head_kernel(%arg0: i32, %arg1: memref<32x128xbf16, #tpu.memory_space<vmem>>, %arg2: memref<128x128xbf16, #tpu.memory_space<vmem>>, %arg3: memref<1x128xf32, #tpu.memory_space<vmem>>, %arg4: memref<128x128xbf16, #tpu.memory_space<vmem>>, %arg5: memref<1x128xf32, #tpu.memory_space<vmem>>, %arg6: memref<32x128xf32, #tpu.memory_space<vmem>>, %arg7: memref<32x128xf32, #tpu.memory_space<vmem>>, %arg8: memref<1x128xf32, #tpu.memory_space<vmem>>, %arg9: memref<1x128xf32, #tpu.memory_space<vmem>>) attributes {dimension_semantics = [#tpu.dimension_semantics<arbitrary>], iteration_bounds = array<i64: 1>, scalar_prefetch = 0 : i64, scratch_operands = 0 : i64, tpu.core_type = #tpu.core_type<tc>, window_params = [{transform_indices = @transform_0, window_bounds = array<i64: 32, 128>}, {pipeline_mode = #tpu.pipeline_mode<synchronous>, transform_indices = @transform_1, window_bounds = array<i64: 128, 128>}, {pipeline_mode = #tpu.pipeline_mode<synchronous>, transform_indices = @transform_2, window_bounds = array<i64: 1, 128>}, {pipeline_mode = #tpu.pipeline_mode<synchronous>, transform_indices = @transform_3, window_bounds = array<i64: 128, 128>}, {pipeline_mode = #tpu.pipeline_mode<synchronous>, transform_indices = @transform_4, window_bounds = array<i64: 1, 128>}, {transform_indices = @transform_5, window_bounds = array<i64: 32, 128>}, {transform_indices = @transform_6, window_bounds = array<i64: 32, 128>}, {pipeline_mode = #tpu.pipeline_mode<synchronous>, transform_indices = @transform_7, window_bounds = array<i64: 1, 128>}, {pipeline_mode = #tpu.pipeline_mode<synchronous>, transform_indices = @transform_8, window_bounds = array<i64: 1, 128>}]} {
    %c0 = arith.constant 0 : index
    %c0_0 = arith.constant 0 : index
    %0 = vector.load %arg1[%c0, %c0_0] : memref<32x128xbf16, #tpu.memory_space<vmem>>, vector<32x128xbf16>
    %c0_1 = arith.constant 0 : index
    %c0_2 = arith.constant 0 : index
    %1 = vector.load %arg2[%c0_1, %c0_2] : memref<128x128xbf16, #tpu.memory_space<vmem>>, vector<128x128xbf16>
    %cst = arith.constant dense<0.000000e+00> : vector<32x128xf32>
    %2 = tpu.matmul %0, %1, %cst {dimension_numbers = #tpu.dot_dimension_numbers<[1], [0], [0], [1], [0, 0, 1, 1], [], []>} : vector<32x128xbf16>, vector<128x128xbf16>, vector<32x128xf32> -> vector<32x128xf32>
    %c0_3 = arith.constant 0 : index
    %c0_4 = arith.constant 0 : index
    %3 = vector.load %arg3[%c0_3, %c0_4] : memref<1x128xf32, #tpu.memory_space<vmem>>, vector<1x128xf32>
    %4 = vector.broadcast %3 : vector<1x128xf32> to vector<32x128xf32>
    %5 = arith.addf %2, %4 : vector<32x128xf32>
    %cst_5 = arith.constant 5.000000e-01 : f32
    %6 = vector.broadcast %cst_5 : f32 to vector<32x128xf32>
    %7 = arith.mulf %6, %5 : vector<32x128xf32>
    %cst_6 = arith.constant 0.707106769 : f32
    %8 = vector.broadcast %cst_6 : f32 to vector<32x128xf32>
    %9 = arith.mulf %5, %8 : vector<32x128xf32>
    %10 = math.erf %9 : vector<32x128xf32>
    %cst_7 = arith.constant 1.000000e+00 : f32
    %11 = vector.broadcast %cst_7 : f32 to vector<32x128xf32>
    %12 = arith.addf %11, %10 : vector<32x128xf32>
    %13 = arith.mulf %7, %12 : vector<32x128xf32>
    %14 = arith.truncf %13 : vector<32x128xf32> to vector<32x128xbf16>
    %c0_8 = arith.constant 0 : index
    %c0_9 = arith.constant 0 : index
    %15 = vector.load %arg4[%c0_8, %c0_9] : memref<128x128xbf16, #tpu.memory_space<vmem>>, vector<128x128xbf16>
    %cst_10 = arith.constant dense<0.000000e+00> : vector<32x128xf32>
    %16 = tpu.matmul %14, %15, %cst_10 {dimension_numbers = #tpu.dot_dimension_numbers<[1], [0], [0], [1], [0, 0, 1, 1], [], []>} : vector<32x128xbf16>, vector<128x128xbf16>, vector<32x128xf32> -> vector<32x128xf32>
    %c0_11 = arith.constant 0 : index
    %c0_12 = arith.constant 0 : index
    %17 = vector.load %arg5[%c0_11, %c0_12] : memref<1x128xf32, #tpu.memory_space<vmem>>, vector<1x128xf32>
    %18 = vector.broadcast %17 : vector<1x128xf32> to vector<32x128xf32>
    %19 = arith.addf %16, %18 : vector<32x128xf32>
    %c0_13 = arith.constant 0 : index
    %c0_14 = arith.constant 0 : index
    %20 = vector.load %arg7[%c0_13, %c0_14] : memref<32x128xf32, #tpu.memory_space<vmem>>, vector<32x128xf32>
    tpu.vector_store %arg7[%c0_13, %c0_14], %13 {strides = array<i32>} : memref<32x128xf32, #tpu.memory_space<vmem>>, vector<32x128xf32>,
    %c0_15 = arith.constant 0 : index
    %c0_16 = arith.constant 0 : index
    %21 = vector.load %arg6[%c0_15, %c0_16] : memref<32x128xf32, #tpu.memory_space<vmem>>, vector<32x128xf32>
    tpu.vector_store %arg6[%c0_15, %c0_16], %19 {strides = array<i32>} : memref<32x128xf32, #tpu.memory_space<vmem>>, vector<32x128xf32>,
    %c32_i32 = arith.constant 32 : i32
    %22 = arith.muli %arg0, %c32_i32 : i32
    %23 = tpu.iota {dimensions = array<i32: 0>} : vector<32x1xi32>
    %24 = vector.broadcast %22 : i32 to vector<32x1xi32>
    %25 = arith.addi %24, %23 : vector<32x1xi32>
    %c32_i32_17 = arith.constant 32 : i32
    %26 = vector.broadcast %c32_i32_17 : i32 to vector<32x1xi32>
    %27 = arith.cmpi slt, %25, %26 : vector<32x1xi32>
    %cst_18 = arith.constant 0.000000e+00 : f32
    %28 = vector.shape_cast %27 : vector<32x1xi1> to vector<32x1xi1>
    %29 = vector.broadcast %28 : vector<32x1xi1> to vector<32x128xi1>
    %30 = vector.broadcast %cst_18 : f32 to vector<32x128xf32>
    %31 = arith.select %29, %19, %30 : vector<32x128xi1>, vector<32x128xf32>
    %c0_i32 = arith.constant 0 : i32
    %32 = arith.cmpi eq, %arg0, %c0_i32 : i32
    %33 = arith.extui %32 : i1 to i32
    %c0_i32_19 = arith.constant 0 : i32
    %34 = arith.cmpi ne, %33, %c0_i32_19 : i32
    scf.if %34 {
      %cst_30 = arith.constant 0.000000e+00 : f32
      %46 = vector.broadcast %cst_30 : f32 to vector<1x128xf32>
      %c0_31 = arith.constant 0 : index
      %c0_32 = arith.constant 0 : index
      %47 = vector.load %arg8[%c0_31, %c0_32] : memref<1x128xf32, #tpu.memory_space<vmem>>, vector<1x128xf32>
      tpu.vector_store %arg8[%c0_31, %c0_32], %46 {strides = array<i32>} : memref<1x128xf32, #tpu.memory_space<vmem>>, vector<1x128xf32>,
      %cst_33 = arith.constant 0.000000e+00 : f32
      %48 = vector.broadcast %cst_33 : f32 to vector<1x128xf32>
      %c0_34 = arith.constant 0 : index
      %c0_35 = arith.constant 0 : index
      %49 = vector.load %arg9[%c0_34, %c0_35] : memref<1x128xf32, #tpu.memory_space<vmem>>, vector<1x128xf32>
      tpu.vector_store %arg9[%c0_34, %c0_35], %48 {strides = array<i32>} : memref<1x128xf32, #tpu.memory_space<vmem>>, vector<1x128xf32>,
    } else {
    }
    %c0_20 = arith.constant 0 : index
    %c0_21 = arith.constant 0 : index
    %35 = vector.load %arg8[%c0_20, %c0_21] : memref<1x128xf32, #tpu.memory_space<vmem>>, vector<1x128xf32>
    %cst_22 = arith.constant dense<0.000000e+00> : vector<128xf32>
    %36 = vector.multi_reduction <add>, %31, %cst_22 [0] : vector<32x128xf32> to vector<128xf32>
    %37 = vector.shape_cast %36 : vector<128xf32> to vector<1x128xf32>
    %38 = arith.addf %35, %37 : vector<1x128xf32>
    %c0_23 = arith.constant 0 : index
    %c0_24 = arith.constant 0 : index
    %39 = vector.load %arg8[%c0_23, %c0_24] : memref<1x128xf32, #tpu.memory_space<vmem>>, vector<1x128xf32>
    tpu.vector_store %arg8[%c0_23, %c0_24], %38 {strides = array<i32>} : memref<1x128xf32, #tpu.memory_space<vmem>>, vector<1x128xf32>,
    %c0_25 = arith.constant 0 : index
    %c0_26 = arith.constant 0 : index
    %40 = vector.load %arg9[%c0_25, %c0_26] : memref<1x128xf32, #tpu.memory_space<vmem>>, vector<1x128xf32>
    %41 = arith.mulf %31, %31 : vector<32x128xf32>
    %cst_27 = arith.constant dense<0.000000e+00> : vector<128xf32>
    %42 = vector.multi_reduction <add>, %41, %cst_27 [0] : vector<32x128xf32> to vector<128xf32>
    %43 = vector.shape_cast %42 : vector<128xf32> to vector<1x128xf32>
    %44 = arith.addf %40, %43 : vector<1x128xf32>
    %c0_28 = arith.constant 0 : index
    %c0_29 = arith.constant 0 : index
    %45 = vector.load %arg9[%c0_28, %c0_29] : memref<1x128xf32, #tpu.memory_space<vmem>>, vector<1x128xf32>
    tpu.vector_store %arg9[%c0_28, %c0_29], %44 {strides = array<i32>} : memref<1x128xf32, #tpu.memory_space<vmem>>, vector<1x128xf32>,
    return
  }
  func.func @transform_0(%arg0: i32) -> (i32, i32) {
    %c0_i32 = arith.constant 0 : i32
    %c0_i32_0 = arith.constant 0 : i32
    return %arg0, %c0_i32 : i32, i32
  }
  func.func @transform_1(%arg0: i32) -> (i32, i32) {
    %c0_i32 = arith.constant 0 : i32
    %c0_i32_0 = arith.constant 0 : i32
    %c0_i32_1 = arith.constant 0 : i32
    return %c0_i32, %c0_i32_0 : i32, i32
  }
  func.func @transform_2(%arg0: i32) -> (i32, i32) {
    %c0_i32 = arith.constant 0 : i32
    %c0_i32_0 = arith.constant 0 : i32
    %c0_i32_1 = arith.constant 0 : i32
    return %c0_i32, %c0_i32_0 : i32, i32
  }
  func.func @transform_3(%arg0: i32) -> (i32, i32) {
    %c0_i32 = arith.constant 0 : i32
    %c0_i32_0 = arith.constant 0 : i32
    %c0_i32_1 = arith.constant 0 : i32
    return %c0_i32, %c0_i32_0 : i32, i32
  }
  func.func @transform_4(%arg0: i32) -> (i32, i32) {
    %c0_i32 = arith.constant 0 : i32
    %c0_i32_0 = arith.constant 0 : i32
    %c0_i32_1 = arith.constant 0 : i32
    return %c0_i32, %c0_i32_0 : i32, i32
  }
  func.func @transform_5(%arg0: i32) -> (i32, i32) {
    %c0_i32 = arith.constant 0 : i32
    %c0_i32_0 = arith.constant 0 : i32
    return %arg0, %c0_i32 : i32, i32
  }
  func.func @transform_6(%arg0: i32) -> (i32, i32) {
    %c0_i32 = arith.constant 0 : i32
    %c0_i32_0 = arith.constant 0 : i32
    return %arg0, %c0_i32 : i32, i32
  }
  func.func @transform_7(%arg0: i32) -> (i32, i32) {
    %c0_i32 = arith.constant 0 : i32
    %c0_i32_0 = arith.constant 0 : i32
    %c0_i32_1 = arith.constant 0 : i32
    return %c0_i32, %c0_i32_0 : i32, i32
  }
  func.func @transform_8(%arg0: i32) -> (i32, i32) {
    %c0_i32 = arith.constant 0 : i32
    %c0_i32_0 = arith.constant 0 : i32
    %c0_i32_1 = arith.constant 0 : i32
    return %c0_i32, %c0_i32_0 : i32, i32
  }
}

</mosaic_0001>

<llo_original>
// kernel: tpu_custom_call.1
$region0: #{tpu_custom_call.1}
  #allocation0 [shape = 'u32[]', space=smem, size = 0x4, offset = 0x4, fixed_abs, tag = 'smem constant byte address 0x4 - core index']
  #allocation1 [shape = 'u32[72,128]{1,0:T(1,128)}', space=vmem, size = 0x9000, scoped, tag = 'internal scratch']
  %s0 = inlined_call_operand.hbm [shape: bf16[32,128], index: 0, kind: input, shape index: {}]
  %s1 = inlined_call_operand.hbm [shape: bf16[128,128], index: 1, kind: input, shape index: {}]
  %s2 = inlined_call_operand.vmem [shape: f32[1,128], index: 2, kind: input, shape index: {}]
  %s3 = inlined_call_operand.hbm [shape: bf16[128,128], index: 3, kind: input, shape index: {}]
  %s4 = inlined_call_operand.vmem [shape: f32[1,128], index: 4, kind: input, shape index: {}]
  %s5 = inlined_call_operand.hbm [shape: f32[32,128], index: 5, kind: output, shape index: {0}]
  %s6 = inlined_call_operand.hbm [shape: f32[32,128], index: 6, kind: output, shape index: {1}]
  %s7 = inlined_call_operand.hbm [shape: f32[1,128], index: 7, kind: output, shape index: {2}]
  %s8 = inlined_call_operand.hbm [shape: f32[1,128], index: 8, kind: output, shape index: {3}]
  %9 = xla_tuple %s5, %s6, %s7, %s8
  %s10 = sld [smem:[#allocation0]]
  $region70: #{tpu_custom_call.1} parent=0
    _
  %s12 = ssub.s32 1, %s10
  %s13 = scalar_select 0, %s12, %s10
  $region1: #{tpu_custom_call.1} parent=0
    #allocation2 [shape = 'u8[8192]{0}', space=vmem, size = 0x2000, scoped, tag = 'input window, operand 0, single buffered']
    #allocation3 [shape = 's32[1]{0}', space=sflag, size = 0x4, scoped, tag = 'scoped memory for tpu_custom_call.1']
    #allocation4 [shape = 's32[1]{0}', space=sflag, size = 0x4, scoped, tag = 'scoped memory for tpu_custom_call.1']
    #allocation5 [shape = 'u8[32768]{0}', space=vmem, size = 0x8000, scoped, tag = 'input window, operand 1, single buffered']
    #allocation6 [shape = 's32[1]{0}', space=sflag, size = 0x4, scoped, tag = 'scoped memory for tpu_custom_call.1']
    #allocation7 [shape = 'u8[32768]{0}', space=vmem, size = 0x8000, scoped, tag = 'input window, operand 3, single buffered']
    #allocation8 [shape = 'u8[16384]{0}', space=vmem, size = 0x4000, scoped, tag = 'output window, operand 0, single buffered']
    #allocation9 [shape = 'u8[16384]{0}', space=vmem, size = 0x4000, scoped, tag = 'output window, operand 1, single buffered']
    #allocation10 [shape = 's32[1]{0}', space=sflag, size = 0x4, scoped, tag = 'scoped memory for tpu_custom_call.1']
    #allocation11 [shape = 'u8[512]{0}', space=vmem, size = 0x400, scoped, tag = 'output window, operand 2, single buffered']
    #allocation12 [shape = 'u8[512]{0}', space=vmem, size = 0x400, scoped, tag = 'output window, operand 3, single buffered']
    #allocation13 [shape = 's32[1]{0}', space=sflag, size = 0x4, scoped, tag = 'scoped memory for tpu_custom_call.1']
    %14 = vsyncpa [#allocation3], 0
    %15 = vsyncpa [#allocation6], 0
    %16 = vsyncpa [#allocation4], 0
    %17 = vsyncpa [#allocation10], 0
    %18 = vsyncpa [#allocation13], 0
    // Predicated region
    $region2: #{tpu_custom_call.1} parent=1 // pred_check
      _
    $region3: #{tpu_custom_call.1} parent=1 // pred_check_branch
      %20 = sbr.rel (0) target = $region5
    $region4: #{tpu_custom_call.1} parent=1 // pred_region
      %22 = vsyncadd [#allocation3], 0
      %s23 = sshll.u32 %s0, 4
      %s24 = int_to_ptr.hbm [resolvable:$true] %s23
      %s25 = sshll.u32 [#allocation2], 4
      %s26 = int_to_ptr.vmem [resolvable:$true] %s25
      %31 = dma.hbm_to_vmem [thread:$0]  %s24, 256, %s26, [#allocation3], 64, 64, 4
    $region5: #{tpu_custom_call.1} parent=1 // pred_fallthru
      _
    // Predicated region
    $region6: #{tpu_custom_call.1} parent=1 // pred_check
      _
    $region7: #{tpu_custom_call.1} parent=1 // pred_check_branch
      %33 = sbr.rel (0) target = $region9
    $region8: #{tpu_custom_call.1} parent=1 // pred_region
      %35 = vsyncadd [#allocation6], 0
      %s36 = sshll.u32 %s1, 4
      %s37 = int_to_ptr.hbm [resolvable:$true] %s36
      %s38 = sshll.u32 [#allocation5], 4
      %s39 = int_to_ptr.vmem [resolvable:$true] %s38
      %44 = dma.hbm_to_vmem [thread:$0]  %s37, 1024, %s39, [#allocation6], 64, 64, 4
    $region9: #{tpu_custom_call.1} parent=1 // pred_fallthru
      _
    // Predicated region
    $region10: #{tpu_custom_call.1} parent=1 // pred_check
      _
    $region11: #{tpu_custom_call.1} parent=1 // pred_check_branch
      %46 = sbr.rel (0) target = $region13
    $region12: #{tpu_custom_call.1} parent=1 // pred_region
      _
    $region13: #{tpu_custom_call.1} parent=1 // pred_fallthru
      _
    // Predicated region
    $region14: #{tpu_custom_call.1} parent=1 // pred_check
      _
    $region15: #{tpu_custom_call.1} parent=1 // pred_check_branch
      %48 = sbr.rel (0) target = $region17
    $region16: #{tpu_custom_call.1} parent=1 // pred_region
      %50 = vsyncadd [#allocation6], 0
      %s51 = sshll.u32 %s3, 4
      %s52 = int_to_ptr.hbm [resolvable:$true] %s51
      %s53 = sshll.u32 [#allocation7], 4
      %s54 = int_to_ptr.vmem [resolvable:$true] %s53
      %59 = dma.hbm_to_vmem [thread:$0]  %s52, 1024, %s54, [#allocation6], 64, 64, 4
    $region17: #{tpu_custom_call.1} parent=1 // pred_fallthru
      _
    // Predicated region
    $region18: #{tpu_custom_call.1} parent=1 // pred_check
      _
    $region19: #{tpu_custom_call.1} parent=1 // pred_check_branch
      %61 = sbr.rel (0) target = $region21
    $region20: #{tpu_custom_call.1} parent=1 // pred_region
      _
    $region21: #{tpu_custom_call.1} parent=1 // pred_fallthru
      _
    // Predicated region
    $region22: #{tpu_custom_call.1} parent=1 // pred_check
      _
    $region23: #{tpu_custom_call.1} parent=1 // pred_check_branch
      %63 = sbr.rel (0) target = $region25
    $region24: #{tpu_custom_call.1} parent=1 // pred_region
      %65 = dma.done [#allocation3], 256
    $region25: #{tpu_custom_call.1} parent=1 // pred_fallthru
      _
    // Predicated region
    $region26: #{tpu_custom_call.1} parent=1 // pred_check
      _
    $region27: #{tpu_custom_call.1} parent=1 // pred_check_branch
      %67 = sbr.rel (0) target = $region29
    $region28: #{tpu_custom_call.1} parent=1 // pred_region
      %69 = dma.done [#allocation6], 1024
    $region29: #{tpu_custom_call.1} parent=1 // pred_fallthru
      _
    // Predicated region
    $region30: #{tpu_custom_call.1} parent=1 // pred_check
      _
    $region31: #{tpu_custom_call.1} parent=1 // pred_check_branch
      %71 = sbr.rel (0) target = $region33
    $region32: #{tpu_custom_call.1} parent=1 // pred_region
      %73 = dma.done [#allocation6], 1024
    $region33: #{tpu_custom_call.1} parent=1 // pred_fallthru
      _
    %v74 = vld [vmem:[#allocation2] sm:$0xf]
    %v75 = vld [vmem:[#allocation2 + $0x4] sm:$0xf]
    %v76 = vld [vmem:[#allocation2 + $0x8] sm:$0xf]
    %v77 = vld [vmem:[#allocation2 + $0xc] sm:$0xf]
    %v78 = vld [vmem:[#allocation5] sm:$0xf]
    %v79 = vld [vmem:[#allocation5 + $0x4] sm:$0xf]
    %v80 = vld [vmem:[#allocation5 + $0x8] sm:$0xf]
    %v81 = vld [vmem:[#allocation5 + $0xc] sm:$0xf]
    %v82 = vld [vmem:[#allocation5 + $0x10] sm:$0xf]
    %v83 = vld [vmem:[#allocation5 + $0x14] sm:$0xf]
    %v84 = vld [vmem:[#allocation5 + $0x18] sm:$0xf]
    %v85 = vld [vmem:[#allocation5 + $0x1c] sm:$0xf]
    %v86 = vld [vmem:[#allocation5 + $0x20] sm:$0xf]
    %v87 = vld [vmem:[#allocation5 + $0x24] sm:$0xf]
    %v88 = vld [vmem:[#allocation5 + $0x28] sm:$0xf]
    %v89 = vld [vmem:[#allocation5 + $0x2c] sm:$0xf]
    %v90 = vld [vmem:[#allocation5 + $0x30] sm:$0xf]
    %v91 = vld [vmem:[#allocation5 + $0x34] sm:$0xf]
    %v92 = vld [vmem:[#allocation5 + $0x38] sm:$0xf]
    %v93 = vld [vmem:[#allocation5 + $0x3c] sm:$0xf]
    %v94 = vld [vmem:[%s2] sm:$0x1]
    %v96 = vperm.slane %v94, 0
    %v102 = vunpack.c.l.b16 %v74
    %v103 = vunpack.c.l.b16 %v75
    %v104 = vunpack.c.l.b16 %v76
    %v105 = vunpack.c.l.b16 %v77
    %v106 = vpack.c.b16 %v103, %v102
    %v107 = vpack.c.b16 %v105, %v104
    %v126 = vunpack.c.l.b16 %v78
    %v127 = vunpack.c.l.b16 %v79
    %v128 = vunpack.c.l.b16 %v80
    %v129 = vunpack.c.l.b16 %v81
    %v130 = vunpack.c.l.b16 %v82
    %v131 = vunpack.c.l.b16 %v83
    %v132 = vunpack.c.l.b16 %v84
    %v133 = vunpack.c.l.b16 %v85
    %v134 = vunpack.c.l.b16 %v86
    %v135 = vunpack.c.l.b16 %v87
    %v136 = vunpack.c.l.b16 %v88
    %v137 = vunpack.c.l.b16 %v89
    %v138 = vunpack.c.l.b16 %v90
    %v139 = vunpack.c.l.b16 %v91
    %v140 = vunpack.c.l.b16 %v92
    %v141 = vunpack.c.l.b16 %v93
    %v142 = vpack.c.b16 %v127, %v126
    %v143 = vpack.c.b16 %v129, %v128
    %v144 = vpack.c.b16 %v131, %v130
    %v145 = vpack.c.b16 %v133, %v132
    %v146 = vpack.c.b16 %v135, %v134
    %v147 = vpack.c.b16 %v137, %v136
    %v148 = vpack.c.b16 %v139, %v138
    %v149 = vpack.c.b16 %v141, %v140
    %158 = vmatpush.bf16.msra.mxu0 %v149
    %159 = vmatpush.bf16.msra.mxu0 %v148
    %160 = vmatpush.bf16.msra.mxu0 %v147
    %161 = vmatpush.bf16.msra.mxu0 %v146
    %162 = vmatpush.bf16.msra.mxu0 %v145
    %163 = vmatpush.bf16.msra.mxu0 %v144
    %164 = vmatpush.bf16.msra.mxu0 %v143
    %165 = vmatpush.bf16.msra.mxu0 %v142
    %166 = vmatmul.bf16.gmra.mxu0 %v106
    %v167 = vpop.f32.mrf.mxu0
    %v168 = vadd.f32 %v96, %v167
    %v169 = vpop.f32.mrf.mxu0
    %v170 = vadd.f32 %v96, %v169
    %171 = vmatmul.bf16.gmra.mxu0 %v107
    %v172 = vpop.f32.mrf.mxu0
    %v173 = vadd.f32 %v96, %v172
    %v174 = vpop.f32.mrf.mxu0
    %v175 = vadd.f32 %v96, %v174
    %176 = vdwg.mxu0
    %v177 = vmul.f32 %v168, 0.5
    %v178 = vmul.f32 %v170, 0.5
    %v179 = vmul.f32 %v173, 0.5
    %v180 = vmul.f32 %v175, 0.5
    %v181 = vmul.f32 %v168, 0.70710677
    %v182 = vmul.f32 %v170, 0.70710677
    %v183 = vmul.f32 %v173, 0.70710677
    %v184 = vmul.f32 %v175, 0.70710677
    %v185 = vmul.f32 %v181, %v181
    %v186 = vmin.f32 16.0, %v185
    %v187 = vmul.f32 %v186, 2.1237322e-06
    %v188 = vadd.f32 %v187, 0.00028619796
    %v189 = vmul.f32 %v186, %v188
    %v190 = vadd.f32 %v189, 0.0036580483
    %v191 = vmul.f32 %v186, %v190
    %v192 = vadd.f32 %v191, 0.05243302
    %v193 = vmul.f32 %v186, %v192
    %v194 = vadd.f32 %v193, 0.18741608
    %v195 = vmul.f32 %v186, %v194
    %v196 = vadd.f32 %v195, 1.1283791
    %v197 = vmul.f32 %v181, %v196
    %v198 = vmul.f32 %v186, 3.8918573e-05
    %v199 = vadd.f32 %v198, 0.001143296
    %v200 = vmul.f32 %v186, %v199
    %v201 = vadd.f32 %v200, 0.014752088
    %v202 = vmul.f32 %v186, %v201
    %v203 = vadd.f32 %v202, 0.112945676
    %v204 = vmul.f32 %v186, %v203
    %v205 = vadd.f32 %v204, 0.4994258
    %v206 = vmul.f32 %v186, %v205
    %v207 = vadd.f32 %v206, 1.0
    %v208 = vrcp.pop %v207
    %v209 = vmul.f32 %v207, %v208
    %v210 = vsub.f32 1.0, %v209
    %v211 = vmul.f32 %v208, %v210
    %v212 = vadd.f32 %v208, %v211
    %vm213 = vweird.f32 %v207
    %vm214 = vweird.f32 %v208
    %vm215 = vmor %vm213, %vm214
    %v216 = vsel %vm215, %v208, %v212
    %v217 = vand.u32 2147483647, %v207
    %vm218 = vcmp.eq.f32.partialorder %v217, 8.507059e+37
    %v219 = vand.u32 %v207, 2147483648
    %v220 = vor.u32 1.1754944e-38, %v219
    %v221 = vsel %vm218, %v220, %v216
    %v222 = vmul.f32 %v197, %v221
    %v223 = vmin.f32 %v222, 1.0
    %v224 = vmax.f32 %v223, -1.0
    %v225 = vmul.f32 %v182, %v182
    %v226 = vmin.f32 16.0, %v225
    %v227 = vmul.f32 %v226, 2.1237322e-06
    %v228 = vadd.f32 %v227, 0.00028619796
    %v229 = vmul.f32 %v226, %v228
    %v230 = vadd.f32 %v229, 0.0036580483
    %v231 = vmul.f32 %v226, %v230
    %v232 = vadd.f32 %v231, 0.05243302
    %v233 = vmul.f32 %v226, %v232
    %v234 = vadd.f32 %v233, 0.18741608
    %v235 = vmul.f32 %v226, %v234
    %v236 = vadd.f32 %v235, 1.1283791
    %v237 = vmul.f32 %v182, %v236
    %v238 = vmul.f32 %v226, 3.8918573e-05
    %v239 = vadd.f32 %v238, 0.001143296
    %v240 = vmul.f32 %v226, %v239
    %v241 = vadd.f32 %v240, 0.014752088
    %v242 = vmul.f32 %v226, %v241
    %v243 = vadd.f32 %v242, 0.112945676
    %v244 = vmul.f32 %v226, %v243
    %v245 = vadd.f32 %v244, 0.4994258
    %v246 = vmul.f32 %v226, %v245
    %v247 = vadd.f32 %v246, 1.0
    %v248 = vrcp.pop %v247
    %v249 = vmul.f32 %v247, %v248
    %v250 = vsub.f32 1.0, %v249
    %v251 = vmul.f32 %v248, %v250
    %v252 = vadd.f32 %v248, %v251
    %vm253 = vweird.f32 %v247
    %vm254 = vweird.f32 %v248
    %vm255 = vmor %vm253, %vm254
    %v256 = vsel %vm255, %v248, %v252
    %v257 = vand.u32 2147483647, %v247
    %vm258 = vcmp.eq.f32.partialorder %v257, 8.507059e+37
    %v259 = vand.u32 %v247, 2147483648
    %v260 = vor.u32 1.1754944e-38, %v259
    %v261 = vsel %vm258, %v260, %v256
    %v262 = vmul.f32 %v237, %v261
    %v263 = vmin.f32 %v262, 1.0
    %v264 = vmax.f32 %v263, -1.0
    %v265 = vmul.f32 %v183, %v183
    %v266 = vmin.f32 16.0, %v265
    %v267 = vmul.f32 %v266, 2.1237322e-06
    %v268 = vadd.f32 %v267, 0.00028619796
    %v269 = vmul.f32 %v266, %v268
    %v270 = vadd.f32 %v269, 0.0036580483
    %v271 = vmul.f32 %v266, %v270
    %v272 = vadd.f32 %v271, 0.05243302
    %v273 = vmul.f32 %v266, %v272
    %v274 = vadd.f32 %v273, 0.18741608
    %v275 = vmul.f32 %v266, %v274
    %v276 = vadd.f32 %v275, 1.1283791
    %v277 = vmul.f32 %v183, %v276
    %v278 = vmul.f32 %v266, 3.8918573e-05
    %v279 = vadd.f32 %v278, 0.001143296
    %v280 = vmul.f32 %v266, %v279
    %v281 = vadd.f32 %v280, 0.014752088
    %v282 = vmul.f32 %v266, %v281
    %v283 = vadd.f32 %v282, 0.112945676
    %v284 = vmul.f32 %v266, %v283
    %v285 = vadd.f32 %v284, 0.4994258
    %v286 = vmul.f32 %v266, %v285
    %v287 = vadd.f32 %v286, 1.0
    %v288 = vrcp.pop %v287
    %v289 = vmul.f32 %v287, %v288
    %v290 = vsub.f32 1.0, %v289
    %v291 = vmul.f32 %v288, %v290
    %v292 = vadd.f32 %v288, %v291
    %vm293 = vweird.f32 %v287
    %vm294 = vweird.f32 %v288
    %vm295 = vmor %vm293, %vm294
    %v296 = vsel %vm295, %v288, %v292
    %v297 = vand.u32 2147483647, %v287
    %vm298 = vcmp.eq.f32.partialorder %v297, 8.507059e+37
    %v299 = vand.u32 %v287, 2147483648
    %v300 = vor.u32 1.1754944e-38, %v299
    %v301 = vsel %vm298, %v300, %v296
    %v302 = vmul.f32 %v277, %v301
    %v303 = vmin.f32 %v302, 1.0
    %v304 = vmax.f32 %v303, -1.0
    %v305 = vmul.f32 %v184, %v184
    %v306 = vmin.f32 16.0, %v305
    %v307 = vmul.f32 %v306, 2.1237322e-06
    %v308 = vadd.f32 %v307, 0.00028619796
    %v309 = vmul.f32 %v306, %v308
    %v310 = vadd.f32 %v309, 0.0036580483
    %v311 = vmul.f32 %v306, %v310
    %v312 = vadd.f32 %v311, 0.05243302
    %v313 = vmul.f32 %v306, %v312
    %v314 = vadd.f32 %v313, 0.18741608
    %v315 = vmul.f32 %v306, %v314
    %v316 = vadd.f32 %v315, 1.1283791
    %v317 = vmul.f32 %v184, %v316
    %v318 = vmul.f32 %v306, 3.8918573e-05
    %v319 = vadd.f32 %v318, 0.001143296
    %v320 = vmul.f32 %v306, %v319
    %v321 = vadd.f32 %v320, 0.014752088
    %v322 = vmul.f32 %v306, %v321
    %v323 = vadd.f32 %v322, 0.112945676
    %v324 = vmul.f32 %v306, %v323
    %v325 = vadd.f32 %v324, 0.4994258
    %v326 = vmul.f32 %v306, %v325
    %v327 = vadd.f32 %v326, 1.0
    %v328 = vrcp.pop %v327
    %v329 = vmul.f32 %v327, %v328
    %v330 = vsub.f32 1.0, %v329
    %v331 = vmul.f32 %v328, %v330
    %v332 = vadd.f32 %v328, %v331
    %vm333 = vweird.f32 %v327
    %vm334 = vweird.f32 %v328
    %vm335 = vmor %vm333, %vm334
    %v336 = vsel %vm335, %v328, %v332
    %v337 = vand.u32 2147483647, %v327
    %vm338 = vcmp.eq.f32.partialorder %v337, 8.507059e+37
    %v339 = vand.u32 %v327, 2147483648
    %v340 = vor.u32 1.1754944e-38, %v339
    %v341 = vsel %vm338, %v340, %v336
    %v342 = vmul.f32 %v317, %v341
    %v343 = vmin.f32 %v342, 1.0
    %v344 = vmax.f32 %v343, -1.0
    %v345 = vadd.f32 %v224, 1.0
    %v346 = vadd.f32 %v264, 1.0
    %v347 = vadd.f32 %v304, 1.0
    %v348 = vadd.f32 %v344, 1.0
    %v349 = vmul.f32 %v177, %v345
    %v350 = vmul.f32 %v178, %v346
    %v351 = vmul.f32 %v179, %v347
    %v352 = vmul.f32 %v180, %v348
    %v353 = vpack.c.bf16 %v350, %v349
    %v354 = vpack.c.bf16 %v352, %v351
    %v355 = vld [vmem:[#allocation7] sm:$0xf]
    %v356 = vld [vmem:[#allocation7 + $0x4] sm:$0xf]
    %v357 = vld [vmem:[#allocation7 + $0x8] sm:$0xf]
    %v358 = vld [vmem:[#allocation7 + $0xc] sm:$0xf]
    %v359 = vld [vmem:[#allocation7 + $0x10] sm:$0xf]
    %v360 = vld [vmem:[#allocation7 + $0x14] sm:$0xf]
    %v361 = vld [vmem:[#allocation7 + $0x18] sm:$0xf]
    %v362 = vld [vmem:[#allocation7 + $0x1c] sm:$0xf]
    %v363 = vld [vmem:[#allocation7 + $0x20] sm:$0xf]
    %v364 = vld [vmem:[#allocation7 + $0x24] sm:$0xf]
    %v365 = vld [vmem:[#allocation7 + $0x28] sm:$0xf]
    %v366 = vld [vmem:[#allocation7 + $0x2c] sm:$0xf]
    %v367 = vld [vmem:[#allocation7 + $0x30] sm:$0xf]
    %v368 = vld [vmem:[#allocation7 + $0x34] sm:$0xf]
    %v369 = vld [vmem:[#allocation7 + $0x38] sm:$0xf]
    %v370 = vld [vmem:[#allocation7 + $0x3c] sm:$0xf]
    %v371 = vld [vmem:[%s4] sm:$0x1]
    %v373 = vperm.slane %v371, 0
    %v391 = vunpack.c.l.b16 %v355
    %v392 = vunpack.c.l.b16 %v356
    %v393 = vunpack.c.l.b16 %v357
    %v394 = vunpack.c.l.b16 %v358
    %v395 = vunpack.c.l.b16 %v359
    %v396 = vunpack.c.l.b16 %v360
    %v397 = vunpack.c.l.b16 %v361
    %v398 = vunpack.c.l.b16 %v362
    %v399 = vunpack.c.l.b16 %v363
    %v400 = vunpack.c.l.b16 %v364
    %v401 = vunpack.c.l.b16 %v365
    %v402 = vunpack.c.l.b16 %v366
    %v403 = vunpack.c.l.b16 %v367
    %v404 = vunpack.c.l.b16 %v368
    %v405 = vunpack.c.l.b16 %v369
    %v406 = vunpack.c.l.b16 %v370
    %v407 = vpack.c.b16 %v392, %v391
    %v408 = vpack.c.b16 %v394, %v393
    %v409 = vpack.c.b16 %v396, %v395
    %v410 = vpack.c.b16 %v398, %v397
    %v411 = vpack.c.b16 %v400, %v399
    %v412 = vpack.c.b16 %v402, %v401
    %v413 = vpack.c.b16 %v404, %v403
    %v414 = vpack.c.b16 %v406, %v405
    %423 = vmatpush.bf16.msra.mxu0 %v414
    %424 = vmatpush.bf16.msra.mxu0 %v413
    %425 = vmatpush.bf16.msra.mxu0 %v412
    %426 = vmatpush.bf16.msra.mxu0 %v411
    %427 = vmatpush.bf16.msra.mxu0 %v410
    %428 = vmatpush.bf16.msra.mxu0 %v409
    %429 = vmatpush.bf16.msra.mxu0 %v408
    %430 = vmatpush.bf16.msra.mxu0 %v407
    %431 = vmatmul.bf16.gmra.mxu0 %v353
    %v432 = vpop.f32.mrf.mxu0
    %v433 = vadd.f32 %v373, %v432
    %v434 = vpop.f32.mrf.mxu0
    %v435 = vadd.f32 %v373, %v434
    %436 = vmatmul.bf16.gmra.mxu0 %v354
    %v437 = vpop.f32.mrf.mxu0
    %v438 = vadd.f32 %v373, %v437
    %v439 = vpop.f32.mrf.mxu0
    %v440 = vadd.f32 %v373, %v439
    %441 = vdwg.mxu0
    %442 = vst [vmem:[#allocation9] sm:$0xff] %v349
    %443 = vst [vmem:[#allocation9 + $0x8] sm:$0xff] %v350
    %444 = vst [vmem:[#allocation9 + $0x10] sm:$0xff] %v351
    %445 = vst [vmem:[#allocation9 + $0x18] sm:$0xff] %v352
    %446 = vst [vmem:[#allocation8] sm:$0xff] %v433
    %447 = vst [vmem:[#allocation8 + $0x8] sm:$0xff] %v435
    %448 = vst [vmem:[#allocation8 + $0x10] sm:$0xff] %v438
    %449 = vst [vmem:[#allocation8 + $0x18] sm:$0xff] %v440
    %s450 = smul.u32 0, 32
    %v451 = vlaneseq
    %v452 = vshrl.u32 %v451, 7
    %v453 = vadd.s32 %v452, 8
    %v454 = vadd.s32 %v452, 16
    %v455 = vadd.s32 %v452, 24
    %v456 = vstv %s450
    %v457 = vadd.s32 %v456, %v452
    %v458 = vadd.s32 %v456, %v453
    %v459 = vadd.s32 %v456, %v454
    %v460 = vadd.s32 %v456, %v455
    %vm461 = vcmp.lt.s32.totalorder %v457, 32
    %vm462 = vcmp.lt.s32.totalorder %v458, 32
    %vm463 = vcmp.lt.s32.totalorder %v459, 32
    %vm464 = vcmp.lt.s32.totalorder %v460, 32
    %v465 = vsel %vm461, 1, 0
    %v466 = vsel %vm462, 1, 0
    %v467 = vsel %vm463, 1, 0
    %v468 = vsel %vm464, 1, 0
    %vm469 = vcmp.eq.s32.totalorder %v465, 1
    %vm470 = vcmp.eq.s32.totalorder %v466, 1
    %vm471 = vcmp.eq.s32.totalorder %v467, 1
    %vm472 = vcmp.eq.s32.totalorder %v468, 1
    %v473 = vsel %vm469, %v433, 0.0
    %v474 = vsel %vm470, %v435, 0.0
    %v475 = vsel %vm471, %v438, 0.0
    %v476 = vsel %vm472, %v440, 0.0
    %p477 = scmp.eq.s32.totalorder 0, 0
    // Predicated region
    $region34: #{tpu_custom_call.1} parent=1 // pred_check
      %p478 = pneg %p477
    $region35: #{tpu_custom_call.1} parent=1 // pred_check_branch
      %480 = sbr.rel (%p478) target = $region37
    $region36: #{tpu_custom_call.1} parent=1 // pred_region
      %481 = vst [vmem:[#allocation11] sm:$0x1] 0.0
      %482 = vst [vmem:[#allocation12] sm:$0x1] 0.0
    $region37: #{tpu_custom_call.1} parent=1 // pred_fallthru
      _
    %v483 = vld [vmem:[#allocation11] sm:$0x1]
    %v484 = vadd.f32 %v473, %v474
    %v485 = vadd.f32 %v484, %v475
    %v486 = vadd.f32 %v485, %v476
    %v487 = vrot.slane %v486, 4
    %v488 = vadd.f32 %v486, %v487
    %v489 = vrot.slane %v488, 2
    %v490 = vadd.f32 %v488, %v489
    %v491 = vrot.slane %v490, 1
    %v492 = vadd.f32 %v490, %v491
    %v493 = vadd.f32 %v483, %v492
    %494 = vst [vmem:[#allocation11] sm:$0x1] %v493
    %v495 = vld [vmem:[#allocation12] sm:$0x1]
    %v496 = vmul.f32 %v473, %v473
    %v497 = vmul.f32 %v474, %v474
    %v498 = vmul.f32 %v475, %v475
    %v499 = vmul.f32 %v476, %v476
    %v500 = vadd.f32 %v496, %v497
    %v501 = vadd.f32 %v500, %v498
    %v502 = vadd.f32 %v501, %v499
    %v503 = vrot.slane %v502, 4
    %v504 = vadd.f32 %v502, %v503
    %v505 = vrot.slane %v504, 2
    %v506 = vadd.f32 %v504, %v505
    %v507 = vrot.slane %v506, 1
    %v508 = vadd.f32 %v506, %v507
    %v509 = vadd.f32 %v495, %v508
    %510 = vst [vmem:[#allocation12] sm:$0x1] %v509
    // Predicated region
    $region38: #{tpu_custom_call.1} parent=1 // pred_check
      _
    $region39: #{tpu_custom_call.1} parent=1 // pred_check_branch
      %512 = sbr.rel (0) target = $region41
    $region40: #{tpu_custom_call.1} parent=1 // pred_region
      %514 = vsyncadd [#allocation4], 0
      %s515 = sshll.u32 [#allocation8], 4
      %s516 = int_to_ptr.vmem [resolvable:$true] %s515
      %s517 = sshll.u32 %s5, 4
      %s518 = int_to_ptr.hbm [resolvable:$true] %s517
      %523 = dma.vmem_to_hbm [thread:$0]  %s516, 512, %s518, [#allocation4], 128, 128, 8
    $region41: #{tpu_custom_call.1} parent=1 // pred_fallthru
      _
    // Predicated region
    $region42: #{tpu_custom_call.1} parent=1 // pred_check
      _
    $region43: #{tpu_custom_call.1} parent=1 // pred_check_branch
      %525 = sbr.rel (0) target = $region45
    $region44: #{tpu_custom_call.1} parent=1 // pred_region
      %527 = vsyncadd [#allocation10], 0
      %s528 = sshll.u32 [#allocation9], 4
      %s529 = int_to_ptr.vmem [resolvable:$true] %s528
      %s530 = sshll.u32 %s6, 4
      %s531 = int_to_ptr.hbm [resolvable:$true] %s530
      %536 = dma.vmem_to_hbm [thread:$0]  %s529, 512, %s531, [#allocation10], 128, 128, 8
    $region45: #{tpu_custom_call.1} parent=1 // pred_fallthru
      _
    // Predicated region
    $region46: #{tpu_custom_call.1} parent=1 // pred_check
      _
    $region47: #{tpu_custom_call.1} parent=1 // pred_check_branch
      %538 = sbr.rel (0) target = $region49
    $region48: #{tpu_custom_call.1} parent=1 // pred_region
      %540 = vsyncadd [#allocation10], 0
      %s542 = sshll.u32 [#allocation11], 4
      %s543 = int_to_ptr.vmem [resolvable:$true] %s542
      %s544 = sshll.u32 %s7, 4
      %s545 = int_to_ptr.hbm [resolvable:$true] %s544
      %547 = dma.vmem_to_hbm [thread:$0]  %s543, 16, %s545, [#allocation10]
    $region49: #{tpu_custom_call.1} parent=1 // pred_fallthru
      _
    // Predicated region
    $region50: #{tpu_custom_call.1} parent=1 // pred_check
      _
    $region51: #{tpu_custom_call.1} parent=1 // pred_check_branch
      %549 = sbr.rel (0) target = $region53
    $region52: #{tpu_custom_call.1} parent=1 // pred_region
      %551 = vsyncadd [#allocation13], 0
      %s553 = sshll.u32 [#allocation12], 4
      %s554 = int_to_ptr.vmem [resolvable:$true] %s553
      %s555 = sshll.u32 %s8, 4
      %s556 = int_to_ptr.hbm [resolvable:$true] %s555
      %558 = dma.vmem_to_hbm [thread:$0]  %s554, 16, %s556, [#allocation13]
    $region53: #{tpu_custom_call.1} parent=1 // pred_fallthru
      _
    // Predicated region
    $region54: #{tpu_custom_call.1} parent=1 // pred_check
      _
    $region55: #{tpu_custom_call.1} parent=1 // pred_check_branch
      %560 = sbr.rel (0) target = $region57
    $region56: #{tpu_custom_call.1} parent=1 // pred_region
      %562 = dma.done [#allocation4], 512
    $region57: #{tpu_custom_call.1} parent=1 // pred_fallthru
      _
    // Predicated region
    $region58: #{tpu_custom_call.1} parent=1 // pred_check
      _
    $region59: #{tpu_custom_call.1} parent=1 // pred_check_branch
      %564 = sbr.rel (0) target = $region61
    $region60: #{tpu_custom_call.1} parent=1 // pred_region
      %566 = dma.done [#allocation10], 512
    $region61: #{tpu_custom_call.1} parent=1 // pred_fallthru
      _
    // Predicated region
    $region62: #{tpu_custom_call.1} parent=1 // pred_check
      _
    $region63: #{tpu_custom_call.1} parent=1 // pred_check_branch
      %568 = sbr.rel (0) target = $region65
    $region64: #{tpu_custom_call.1} parent=1 // pred_region
      %570 = dma.done [#allocation10], 16
    $region65: #{tpu_custom_call.1} parent=1 // pred_fallthru
      _
    // Predicated region
    $region66: #{tpu_custom_call.1} parent=1 // pred_check
      _
    $region67: #{tpu_custom_call.1} parent=1 // pred_check_branch
      %572 = sbr.rel (0) target = $region69
    $region68: #{tpu_custom_call.1} parent=1 // pred_region
      %574 = dma.done [#allocation13], 16
    $region69: #{tpu_custom_call.1} parent=1 // pred_fallthru
      _
    %575 = vsyncpa [#allocation3], 1
    %576 = vsyncpa [#allocation6], 1
    %577 = vsyncpa [#allocation4], 1
    %578 = vsyncpa [#allocation10], 1
    %579 = vsyncpa [#allocation13], 1

</llo_original>
